<compile_context>
chip_gen: v5e
topology: v5e:2x2
jax: 0.10.0
libtpu: 0.0.40
codegen_flags: <defaults>
</compile_context>

<pallas_src>
import jax
import jax.numpy as jnp
from jax.experimental import pallas as pl
from jax.experimental.pallas import tpu as pltpu


def add_kernel(a_ref, b_ref, o_ref):
    # Whole-array VPU elementwise add on a single resident VMEM block.
    o_ref[...] = a_ref[...] + b_ref[...]


def pallas_add(x441, x407):
    assert x441.shape == x407.shape and x441.dtype == x407.dtype
    B, S, H = x441.shape  # (1, 384, 256)

    # Squeeze the size-1 batch dim; present a clean 2-D (sublane, lane) layout.
    a2 = x441.reshape(S, H)
    b2 = x407.reshape(S, H)

    # Whole-array-in-VMEM specs: no block pipeline, no double buffering.
    vmem_spec = pl.BlockSpec(memory_space=pltpu.VMEM)

    bytes_per_elem = jnp.dtype(x441.dtype).itemsize
    out2 = pl.pallas_call(
        add_kernel,
        out_shape=jax.ShapeDtypeStruct((S, H), x441.dtype),
        in_specs=[vmem_spec, vmem_spec],
        out_specs=vmem_spec,
        # Output reuses x441's buffer (effective when x441 is donated).
        input_output_aliases={0: 0},
        cost_estimate=pl.CostEstimate(
            flops=S * H,
            transcendentals=0,
            bytes_accessed=3 * S * H * bytes_per_elem,
        ),
    )(a2, b2)

    return out2.reshape(B, S, H)


# Donate x441 at the jit boundary: it is dead after the add, so the aliased
# output can genuinely reuse its HBM allocation.
pallas_add_jit = jax.jit(pallas_add, donate_argnums=(0,))


if __name__ == "__main__":
    key = jax.random.PRNGKey(0)
    k1, k2 = jax.random.split(key)
    # Shapes implied by the module's forward: (1, 384, 256)
    x441 = jax.random.normal(k1, (1, 384, 256), dtype=jnp.float32)
    x407 = jax.random.normal(k2, (1, 384, 256), dtype=jnp.float32)

    ref = x441 + x407  # pure-JAX reference (computed before x441 is donated)
    jax.block_until_ready(ref)

    out = pallas_add_jit(x441, x407)
    jax.block_until_ready(out)

    assert out.shape == (1, 384, 256)
    assert jnp.allclose(out, ref, atol=1e-6), "mismatch vs reference"
    print("KERNEL_OK")
</pallas_src>

<mosaic_0001>
module attributes {stable_mosaic.version = 11 : i64} {
  func.func @add_kernel(%arg0: memref<384x256xf32, #tpu.memory_space<vmem>>, %arg1: memref<384x256xf32, #tpu.memory_space<vmem>>, %arg2: memref<384x256xf32, #tpu.memory_space<vmem>>) attributes {dimension_semantics = [], scalar_prefetch = 0 : i64, scratch_operands = 0 : i64, tpu.core_type = #tpu.core_type<tc>} {
    %c0 = arith.constant 0 : index
    %c0_0 = arith.constant 0 : index
    %0 = vector.load %arg0[%c0, %c0_0] : memref<384x256xf32, #tpu.memory_space<vmem>>, vector<384x256xf32>
    %c0_1 = arith.constant 0 : index
    %c0_2 = arith.constant 0 : index
    %1 = vector.load %arg1[%c0_1, %c0_2] : memref<384x256xf32, #tpu.memory_space<vmem>>, vector<384x256xf32>
    %2 = arith.addf %0, %1 : vector<384x256xf32>
    %c0_3 = arith.constant 0 : index
    %c0_4 = arith.constant 0 : index
    %3 = vector.load %arg2[%c0_3, %c0_4] : memref<384x256xf32, #tpu.memory_space<vmem>>, vector<384x256xf32>
    tpu.vector_store %arg2[%c0_3, %c0_4], %2 {strides = array<i32>} : memref<384x256xf32, #tpu.memory_space<vmem>>, vector<384x256xf32>,
    return
  }
}

</mosaic_0001>

<llo_original>
// kernel: pallas_add.1
$region0: #{pallas_add.1}
  #allocation0 [shape = 'u32[]', space=smem, size = 0x4, offset = 0x4, fixed_abs, tag = 'smem constant byte address 0x4 - core index']
  #allocation1 [shape = 'u32[72,128]{1,0:T(1,128)}', space=vmem, size = 0x9000, scoped, tag = 'internal scratch']
  %s0 = inlined_call_operand.hbm [shape: f32[384,256], index: 0, kind: input, shape index: {}, may-alias: {0,2}]
  %s1 = inlined_call_operand.hbm [shape: f32[384,256], index: 1, kind: input, shape index: {}]
  %s2 = inlined_call_operand.hbm [shape: f32[384,256], index: 2, kind: output, shape index: {}, may-alias: {0,2}]
  %s3 = sld [smem:[#allocation0]]
  $region26: #{pallas_add.1} parent=0
    _
  %s5 = ssub.s32 1, %s3
  %s6 = scalar_select 0, %s5, %s3
  $region1: #{pallas_add.1} parent=0
    #allocation2 [shape = 'u8[393216]{0}', space=vmem, size = 0x60000, scoped, tag = 'input window, operand 0, single buffered']
    #allocation3 [shape = 's32[1]{0}', space=sflag, size = 0x4, scoped, tag = 'scoped memory for pallas_add.1']
    #allocation4 [shape = 's32[1]{0}', space=sflag, size = 0x4, scoped, tag = 'scoped memory for pallas_add.1']
    #allocation5 [shape = 'u8[393216]{0}', space=vmem, size = 0x60000, scoped, tag = 'input window, operand 1, single buffered']
    #allocation6 [shape = 's32[1]{0}', space=sflag, size = 0x4, scoped, tag = 'scoped memory for pallas_add.1']
    #allocation7 [shape = 'u8[393216]{0}', space=vmem, size = 0x60000, scoped, tag = 'output window, operand 0, single buffered']
    %7 = vsyncpa [#allocation3], 0
    %8 = vsyncpa [#allocation6], 0
    %9 = vsyncpa [#allocation4], 0
    // Predicated region
    $region2: #{pallas_add.1} parent=1 // pred_check
      _
    $region3: #{pallas_add.1} parent=1 // pred_check_branch
      %11 = sbr.rel (0) target = $region5
    $region4: #{pallas_add.1} parent=1 // pred_region
      %13 = vsyncadd [#allocation3], 0
      %s14 = sshll.u32 %s0, 4
      %s15 = int_to_ptr.hbm [resolvable:$true] %s14
      %s16 = sshll.u32 [#allocation2], 4
      %s17 = int_to_ptr.vmem [resolvable:$true] %s16
      %22 = dma.hbm_to_vmem [thread:$0]  %s15, 12288, %s17, [#allocation3], 256, 256, 16
    $region5: #{pallas_add.1} parent=1 // pred_fallthru
      _
    // Predicated region
    $region6: #{pallas_add.1} parent=1 // pred_check
      _
    $region7: #{pallas_add.1} parent=1 // pred_check_branch
      %24 = sbr.rel (0) target = $region9
    $region8: #{pallas_add.1} parent=1 // pred_region
      %26 = vsyncadd [#allocation6], 0
      %s27 = sshll.u32 %s1, 4
      %s28 = int_to_ptr.hbm [resolvable:$true] %s27
      %s29 = sshll.u32 [#allocation5], 4
      %s30 = int_to_ptr.vmem [resolvable:$true] %s29
      %35 = dma.hbm_to_vmem [thread:$0]  %s28, 12288, %s30, [#allocation6], 256, 256, 16
    $region9: #{pallas_add.1} parent=1 // pred_fallthru
      _
    // Predicated region
    $region10: #{pallas_add.1} parent=1 // pred_check
      _
    $region11: #{pallas_add.1} parent=1 // pred_check_branch
      %37 = sbr.rel (0) target = $region13
    $region12: #{pallas_add.1} parent=1 // pred_region
      %39 = dma.done [#allocation3], 12288
    $region13: #{pallas_add.1} parent=1 // pred_fallthru
      _
    // Predicated region
    $region14: #{pallas_add.1} parent=1 // pred_check
      _
    $region15: #{pallas_add.1} parent=1 // pred_check_branch
      %41 = sbr.rel (0) target = $region17
    $region16: #{pallas_add.1} parent=1 // pred_region
      %43 = dma.done [#allocation6], 12288
    $region17: #{pallas_add.1} parent=1 // pred_fallthru
      _
    %v44 = vld [vmem:[#allocation2] sm:$0xff]
    %v45 = vld [vmem:[#allocation2 + $0x8] sm:$0xff]
    %v46 = vld [vmem:[#allocation2 + $0x10] sm:$0xff]
    %v47 = vld [vmem:[#allocation2 + $0x18] sm:$0xff]
    %v48 = vld [vmem:[#allocation2 + $0x20] sm:$0xff]
    %v49 = vld [vmem:[#allocation2 + $0x28] sm:$0xff]
    %v50 = vld [vmem:[#allocation2 + $0x30] sm:$0xff]
    %v51 = vld [vmem:[#allocation2 + $0x38] sm:$0xff]
    %v52 = vld [vmem:[#allocation2 + $0x40] sm:$0xff]
    %v53 = vld [vmem:[#allocation2 + $0x48] sm:$0xff]
    %v54 = vld [vmem:[#allocation2 + $0x50] sm:$0xff]
    %v55 = vld [vmem:[#allocation2 + $0x58] sm:$0xff]
    %v56 = vld [vmem:[#allocation2 + $0x60] sm:$0xff]
    %v57 = vld [vmem:[#allocation2 + $0x68] sm:$0xff]
    %v58 = vld [vmem:[#allocation2 + $0x70] sm:$0xff]
    %v59 = vld [vmem:[#allocation2 + $0x78] sm:$0xff]
    %v60 = vld [vmem:[#allocation2 + $0x80] sm:$0xff]
    %v61 = vld [vmem:[#allocation2 + $0x88] sm:$0xff]
    %v62 = vld [vmem:[#allocation2 + $0x90] sm:$0xff]
    %v63 = vld [vmem:[#allocation2 + $0x98] sm:$0xff]
    %v64 = vld [vmem:[#allocation2 + $0xa0] sm:$0xff]
    %v65 = vld [vmem:[#allocation2 + $0xa8] sm:$0xff]
    %v66 = vld [vmem:[#allocation2 + $0xb0] sm:$0xff]
    %v67 = vld [vmem:[#allocation2 + $0xb8] sm:$0xff]
    %v68 = vld [vmem:[#allocation2 + $0xc0] sm:$0xff]
    %v69 = vld [vmem:[#allocation2 + $0xc8] sm:$0xff]
    %v70 = vld [vmem:[#allocation2 + $0xd0] sm:$0xff]
    %v71 = vld [vmem:[#allocation2 + $0xd8] sm:$0xff]
    %v72 = vld [vmem:[#allocation2 + $0xe0] sm:$0xff]
    %v73 = vld [vmem:[#allocation2 + $0xe8] sm:$0xff]
    %v74 = vld [vmem:[#allocation2 + $0xf0] sm:$0xff]
    %v75 = vld [vmem:[#allocation2 + $0xf8] sm:$0xff]
    %v76 = vld [vmem:[#allocation2 + $0x100] sm:$0xff]
    %v77 = vld [vmem:[#allocation2 + $0x108] sm:$0xff]
    %v78 = vld [vmem:[#allocation2 + $0x110] sm:$0xff]
    %v79 = vld [vmem:[#allocation2 + $0x118] sm:$0xff]
    %v80 = vld [vmem:[#allocation2 + $0x120] sm:$0xff]
    %v81 = vld [vmem:[#allocation2 + $0x128] sm:$0xff]
    %v82 = vld [vmem:[#allocation2 + $0x130] sm:$0xff]
    %v83 = vld [vmem:[#allocation2 + $0x138] sm:$0xff]
    %v84 = vld [vmem:[#allocation2 + $0x140] sm:$0xff]
    %v85 = vld [vmem:[#allocation2 + $0x148] sm:$0xff]
    %v86 = vld [vmem:[#allocation2 + $0x150] sm:$0xff]
    %v87 = vld [vmem:[#allocation2 + $0x158] sm:$0xff]
    %v88 = vld [vmem:[#allocation2 + $0x160] sm:$0xff]
    %v89 = vld [vmem:[#allocation2 + $0x168] sm:$0xff]
    %v90 = vld [vmem:[#allocation2 + $0x170] sm:$0xff]
    %v91 = vld [vmem:[#allocation2 + $0x178] sm:$0xff]
    %v92 = vld [vmem:[#allocation2 + $0x180] sm:$0xff]
    %v93 = vld [vmem:[#allocation2 + $0x188] sm:$0xff]
    %v94 = vld [vmem:[#allocation2 + $0x190] sm:$0xff]
    %v95 = vld [vmem:[#allocation2 + $0x198] sm:$0xff]
    %v96 = vld [vmem:[#allocation2 + $0x1a0] sm:$0xff]
    %v97 = vld [vmem:[#allocation2 + $0x1a8] sm:$0xff]
    %v98 = vld [vmem:[#allocation2 + $0x1b0] sm:$0xff]
    %v99 = vld [vmem:[#allocation2 + $0x1b8] sm:$0xff]
    %v100 = vld [vmem:[#allocation2 + $0x1c0] sm:$0xff]
    %v101 = vld [vmem:[#allocation2 + $0x1c8] sm:$0xff]
    %v102 = vld [vmem:[#allocation2 + $0x1d0] sm:$0xff]
    %v103 = vld [vmem:[#allocation2 + $0x1d8] sm:$0xff]
    %v104 = vld [vmem:[#allocation2 + $0x1e0] sm:$0xff]
    %v105 = vld [vmem:[#allocation2 + $0x1e8] sm:$0xff]
    %v106 = vld [vmem:[#allocation2 + $0x1f0] sm:$0xff]
    %v107 = vld [vmem:[#allocation2 + $0x1f8] sm:$0xff]
    %v108 = vld [vmem:[#allocation2 + $0x200] sm:$0xff]
    %v109 = vld [vmem:[#allocation2 + $0x208] sm:$0xff]
    %v110 = vld [vmem:[#allocation2 + $0x210] sm:$0xff]
    %v111 = vld [vmem:[#allocation2 + $0x218] sm:$0xff]
    %v112 = vld [vmem:[#allocation2 + $0x220] sm:$0xff]
    %v113 = vld [vmem:[#allocation2 + $0x228] sm:$0xff]
    %v114 = vld [vmem:[#allocation2 + $0x230] sm:$0xff]
    %v115 = vld [vmem:[#allocation2 + $0x238] sm:$0xff]
    %v116 = vld [vmem:[#allocation2 + $0x240] sm:$0xff]
    %v117 = vld [vmem:[#allocation2 + $0x248] sm:$0xff]
    %v118 = vld [vmem:[#allocation2 + $0x250] sm:$0xff]
    %v119 = vld [vmem:[#allocation2 + $0x258] sm:$0xff]
    %v120 = vld [vmem:[#allocation2 + $0x260] sm:$0xff]
    %v121 = vld [vmem:[#allocation2 + $0x268] sm:$0xff]
    %v122 = vld [vmem:[#allocation2 + $0x270] sm:$0xff]
    %v123 = vld [vmem:[#allocation2 + $0x278] sm:$0xff]
    %v124 = vld [vmem:[#allocation2 + $0x280] sm:$0xff]
    %v125 = vld [vmem:[#allocation2 + $0x288] sm:$0xff]
    %v126 = vld [vmem:[#allocation2 + $0x290] sm:$0xff]
    %v127 = vld [vmem:[#allocation2 + $0x298] sm:$0xff]
    %v128 = vld [vmem:[#allocation2 + $0x2a0] sm:$0xff]
    %v129 = vld [vmem:[#allocation2 + $0x2a8] sm:$0xff]
    %v130 = vld [vmem:[#allocation2 + $0x2b0] sm:$0xff]
    %v131 = vld [vmem:[#allocation2 + $0x2b8] sm:$0xff]
    %v132 = vld [vmem:[#allocation2 + $0x2c0] sm:$0xff]
    %v133 = vld [vmem:[#allocation2 + $0x2c8] sm:$0xff]
    %v134 = vld [vmem:[#allocation2 + $0x2d0] sm:$0xff]
    %v135 = vld [vmem:[#allocation2 + $0x2d8] sm:$0xff]
    %v136 = vld [vmem:[#allocation2 + $0x2e0] sm:$0xff]
    %v137 = vld [vmem:[#allocation2 + $0x2e8] sm:$0xff]
    %v138 = vld [vmem:[#allocation2 + $0x2f0] sm:$0xff]
    %v139 = vld [vmem:[#allocation2 + $0x2f8] sm:$0xff]
    %v140 = vld [vmem:[#allocation5] sm:$0xff]
    %v141 = vld [vmem:[#allocation5 + $0x8] sm:$0xff]
    %v142 = vld [vmem:[#allocation5 + $0x10] sm:$0xff]
    %v143 = vld [vmem:[#allocation5 + $0x18] sm:$0xff]
    %v144 = vld [vmem:[#allocation5 + $0x20] sm:$0xff]
    %v145 = vld [vmem:[#allocation5 + $0x28] sm:$0xff]
    %v146 = vld [vmem:[#allocation5 + $0x30] sm:$0xff]
    %v147 = vld [vmem:[#allocation5 + $0x38] sm:$0xff]
    %v148 = vld [vmem:[#allocation5 + $0x40] sm:$0xff]
    %v149 = vld [vmem:[#allocation5 + $0x48] sm:$0xff]
    %v150 = vld [vmem:[#allocation5 + $0x50] sm:$0xff]
    %v151 = vld [vmem:[#allocation5 + $0x58] sm:$0xff]
    %v152 = vld [vmem:[#allocation5 + $0x60] sm:$0xff]
    %v153 = vld [vmem:[#allocation5 + $0x68] sm:$0xff]
    %v154 = vld [vmem:[#allocation5 + $0x70] sm:$0xff]
    %v155 = vld [vmem:[#allocation5 + $0x78] sm:$0xff]
    %v156 = vld [vmem:[#allocation5 + $0x80] sm:$0xff]
    %v157 = vld [vmem:[#allocation5 + $0x88] sm:$0xff]
    %v158 = vld [vmem:[#allocation5 + $0x90] sm:$0xff]
    %v159 = vld [vmem:[#allocation5 + $0x98] sm:$0xff]
    %v160 = vld [vmem:[#allocation5 + $0xa0] sm:$0xff]
    %v161 = vld [vmem:[#allocation5 + $0xa8] sm:$0xff]
    %v162 = vld [vmem:[#allocation5 + $0xb0] sm:$0xff]
    %v163 = vld [vmem:[#allocation5 + $0xb8] sm:$0xff]
    %v164 = vld [vmem:[#allocation5 + $0xc0] sm:$0xff]
    %v165 = vld [vmem:[#allocation5 + $0xc8] sm:$0xff]
    %v166 = vld [vmem:[#allocation5 + $0xd0] sm:$0xff]
    %v167 = vld [vmem:[#allocation5 + $0xd8] sm:$0xff]
    %v168 = vld [vmem:[#allocation5 + $0xe0] sm:$0xff]
    %v169 = vld [vmem:[#allocation5 + $0xe8] sm:$0xff]
    %v170 = vld [vmem:[#allocation5 + $0xf0] sm:$0xff]
    %v171 = vld [vmem:[#allocation5 + $0xf8] sm:$0xff]
    %v172 = vld [vmem:[#allocation5 + $0x100] sm:$0xff]
    %v173 = vld [vmem:[#allocation5 + $0x108] sm:$0xff]
    %v174 = vld [vmem:[#allocation5 + $0x110] sm:$0xff]
    %v175 = vld [vmem:[#allocation5 + $0x118] sm:$0xff]
    %v176 = vld [vmem:[#allocation5 + $0x120] sm:$0xff]
    %v177 = vld [vmem:[#allocation5 + $0x128] sm:$0xff]
    %v178 = vld [vmem:[#allocation5 + $0x130] sm:$0xff]
    %v179 = vld [vmem:[#allocation5 + $0x138] sm:$0xff]
    %v180 = vld [vmem:[#allocation5 + $0x140] sm:$0xff]
    %v181 = vld [vmem:[#allocation5 + $0x148] sm:$0xff]
    %v182 = vld [vmem:[#allocation5 + $0x150] sm:$0xff]
    %v183 = vld [vmem:[#allocation5 + $0x158] sm:$0xff]
    %v184 = vld [vmem:[#allocation5 + $0x160] sm:$0xff]
    %v185 = vld [vmem:[#allocation5 + $0x168] sm:$0xff]
    %v186 = vld [vmem:[#allocation5 + $0x170] sm:$0xff]
    %v187 = vld [vmem:[#allocation5 + $0x178] sm:$0xff]
    %v188 = vld [vmem:[#allocation5 + $0x180] sm:$0xff]
    %v189 = vld [vmem:[#allocation5 + $0x188] sm:$0xff]
    %v190 = vld [vmem:[#allocation5 + $0x190] sm:$0xff]
    %v191 = vld [vmem:[#allocation5 + $0x198] sm:$0xff]
    %v192 = vld [vmem:[#allocation5 + $0x1a0] sm:$0xff]
    %v193 = vld [vmem:[#allocation5 + $0x1a8] sm:$0xff]
    %v194 = vld [vmem:[#allocation5 + $0x1b0] sm:$0xff]
    %v195 = vld [vmem:[#allocation5 + $0x1b8] sm:$0xff]
    %v196 = vld [vmem:[#allocation5 + $0x1c0] sm:$0xff]
    %v197 = vld [vmem:[#allocation5 + $0x1c8] sm:$0xff]
    %v198 = vld [vmem:[#allocation5 + $0x1d0] sm:$0xff]
    %v199 = vld [vmem:[#allocation5 + $0x1d8] sm:$0xff]
    %v200 = vld [vmem:[#allocation5 + $0x1e0] sm:$0xff]
    %v201 = vld [vmem:[#allocation5 + $0x1e8] sm:$0xff]
    %v202 = vld [vmem:[#allocation5 + $0x1f0] sm:$0xff]
    %v203 = vld [vmem:[#allocation5 + $0x1f8] sm:$0xff]
    %v204 = vld [vmem:[#allocation5 + $0x200] sm:$0xff]
    %v205 = vld [vmem:[#allocation5 + $0x208] sm:$0xff]
    %v206 = vld [vmem:[#allocation5 + $0x210] sm:$0xff]
    %v207 = vld [vmem:[#allocation5 + $0x218] sm:$0xff]
    %v208 = vld [vmem:[#allocation5 + $0x220] sm:$0xff]
    %v209 = vld [vmem:[#allocation5 + $0x228] sm:$0xff]
    %v210 = vld [vmem:[#allocation5 + $0x230] sm:$0xff]
    %v211 = vld [vmem:[#allocation5 + $0x238] sm:$0xff]
    %v212 = vld [vmem:[#allocation5 + $0x240] sm:$0xff]
    %v213 = vld [vmem:[#allocation5 + $0x248] sm:$0xff]
    %v214 = vld [vmem:[#allocation5 + $0x250] sm:$0xff]
    %v215 = vld [vmem:[#allocation5 + $0x258] sm:$0xff]
    %v216 = vld [vmem:[#allocation5 + $0x260] sm:$0xff]
    %v217 = vld [vmem:[#allocation5 + $0x268] sm:$0xff]
    %v218 = vld [vmem:[#allocation5 + $0x270] sm:$0xff]
    %v219 = vld [vmem:[#allocation5 + $0x278] sm:$0xff]
    %v220 = vld [vmem:[#allocation5 + $0x280] sm:$0xff]
    %v221 = vld [vmem:[#allocation5 + $0x288] sm:$0xff]
    %v222 = vld [vmem:[#allocation5 + $0x290] sm:$0xff]
    %v223 = vld [vmem:[#allocation5 + $0x298] sm:$0xff]
    %v224 = vld [vmem:[#allocation5 + $0x2a0] sm:$0xff]
    %v225 = vld [vmem:[#allocation5 + $0x2a8] sm:$0xff]
    %v226 = vld [vmem:[#allocation5 + $0x2b0] sm:$0xff]
    %v227 = vld [vmem:[#allocation5 + $0x2b8] sm:$0xff]
    %v228 = vld [vmem:[#allocation5 + $0x2c0] sm:$0xff]
    %v229 = vld [vmem:[#allocation5 + $0x2c8] sm:$0xff]
    %v230 = vld [vmem:[#allocation5 + $0x2d0] sm:$0xff]
    %v231 = vld [vmem:[#allocation5 + $0x2d8] sm:$0xff]
    %v232 = vld [vmem:[#allocation5 + $0x2e0] sm:$0xff]
    %v233 = vld [vmem:[#allocation5 + $0x2e8] sm:$0xff]
    %v234 = vld [vmem:[#allocation5 + $0x2f0] sm:$0xff]
    %v235 = vld [vmem:[#allocation5 + $0x2f8] sm:$0xff]
    %v236 = vadd.f32 %v44, %v140
    %v237 = vadd.f32 %v45, %v141
    %v238 = vadd.f32 %v46, %v142
    %v239 = vadd.f32 %v47, %v143
    %v240 = vadd.f32 %v48, %v144
    %v241 = vadd.f32 %v49, %v145
    %v242 = vadd.f32 %v50, %v146
    %v243 = vadd.f32 %v51, %v147
    %v244 = vadd.f32 %v52, %v148
    %v245 = vadd.f32 %v53, %v149
    %v246 = vadd.f32 %v54, %v150
    %v247 = vadd.f32 %v55, %v151
    %v248 = vadd.f32 %v56, %v152
    %v249 = vadd.f32 %v57, %v153
    %v250 = vadd.f32 %v58, %v154
    %v251 = vadd.f32 %v59, %v155
    %v252 = vadd.f32 %v60, %v156
    %v253 = vadd.f32 %v61, %v157
    %v254 = vadd.f32 %v62, %v158
    %v255 = vadd.f32 %v63, %v159
    %v256 = vadd.f32 %v64, %v160
    %v257 = vadd.f32 %v65, %v161
    %v258 = vadd.f32 %v66, %v162
    %v259 = vadd.f32 %v67, %v163
    %v260 = vadd.f32 %v68, %v164
    %v261 = vadd.f32 %v69, %v165
    %v262 = vadd.f32 %v70, %v166
    %v263 = vadd.f32 %v71, %v167
    %v264 = vadd.f32 %v72, %v168
    %v265 = vadd.f32 %v73, %v169
    %v266 = vadd.f32 %v74, %v170
    %v267 = vadd.f32 %v75, %v171
    %v268 = vadd.f32 %v76, %v172
    %v269 = vadd.f32 %v77, %v173
    %v270 = vadd.f32 %v78, %v174
    %v271 = vadd.f32 %v79, %v175
    %v272 = vadd.f32 %v80, %v176
    %v273 = vadd.f32 %v81, %v177
    %v274 = vadd.f32 %v82, %v178
    %v275 = vadd.f32 %v83, %v179
    %v276 = vadd.f32 %v84, %v180
    %v277 = vadd.f32 %v85, %v181
    %v278 = vadd.f32 %v86, %v182
    %v279 = vadd.f32 %v87, %v183
    %v280 = vadd.f32 %v88, %v184
    %v281 = vadd.f32 %v89, %v185
    %v282 = vadd.f32 %v90, %v186
    %v283 = vadd.f32 %v91, %v187
    %v284 = vadd.f32 %v92, %v188
    %v285 = vadd.f32 %v93, %v189
    %v286 = vadd.f32 %v94, %v190
    %v287 = vadd.f32 %v95, %v191
    %v288 = vadd.f32 %v96, %v192
    %v289 = vadd.f32 %v97, %v193
    %v290 = vadd.f32 %v98, %v194
    %v291 = vadd.f32 %v99, %v195
    %v292 = vadd.f32 %v100, %v196
    %v293 = vadd.f32 %v101, %v197
    %v294 = vadd.f32 %v102, %v198
    %v295 = vadd.f32 %v103, %v199
    %v296 = vadd.f32 %v104, %v200
    %v297 = vadd.f32 %v105, %v201
    %v298 = vadd.f32 %v106, %v202
    %v299 = vadd.f32 %v107, %v203
    %v300 = vadd.f32 %v108, %v204
    %v301 = vadd.f32 %v109, %v205
    %v302 = vadd.f32 %v110, %v206
    %v303 = vadd.f32 %v111, %v207
    %v304 = vadd.f32 %v112, %v208
    %v305 = vadd.f32 %v113, %v209
    %v306 = vadd.f32 %v114, %v210
    %v307 = vadd.f32 %v115, %v211
    %v308 = vadd.f32 %v116, %v212
    %v309 = vadd.f32 %v117, %v213
    %v310 = vadd.f32 %v118, %v214
    %v311 = vadd.f32 %v119, %v215
    %v312 = vadd.f32 %v120, %v216
    %v313 = vadd.f32 %v121, %v217
    %v314 = vadd.f32 %v122, %v218
    %v315 = vadd.f32 %v123, %v219
    %v316 = vadd.f32 %v124, %v220
    %v317 = vadd.f32 %v125, %v221
    %v318 = vadd.f32 %v126, %v222
    %v319 = vadd.f32 %v127, %v223
    %v320 = vadd.f32 %v128, %v224
    %v321 = vadd.f32 %v129, %v225
    %v322 = vadd.f32 %v130, %v226
    %v323 = vadd.f32 %v131, %v227
    %v324 = vadd.f32 %v132, %v228
    %v325 = vadd.f32 %v133, %v229
    %v326 = vadd.f32 %v134, %v230
    %v327 = vadd.f32 %v135, %v231
    %v328 = vadd.f32 %v136, %v232
    %v329 = vadd.f32 %v137, %v233
    %v330 = vadd.f32 %v138, %v234
    %v331 = vadd.f32 %v139, %v235
    %332 = vst [vmem:[#allocation7] sm:$0xff] %v236
    %333 = vst [vmem:[#allocation7 + $0x8] sm:$0xff] %v237
    %334 = vst [vmem:[#allocation7 + $0x10] sm:$0xff] %v238
    %335 = vst [vmem:[#allocation7 + $0x18] sm:$0xff] %v239
    %336 = vst [vmem:[#allocation7 + $0x20] sm:$0xff] %v240
    %337 = vst [vmem:[#allocation7 + $0x28] sm:$0xff] %v241
    %338 = vst [vmem:[#allocation7 + $0x30] sm:$0xff] %v242
    %339 = vst [vmem:[#allocation7 + $0x38] sm:$0xff] %v243
    %340 = vst [vmem:[#allocation7 + $0x40] sm:$0xff] %v244
    %341 = vst [vmem:[#allocation7 + $0x48] sm:$0xff] %v245
    %342 = vst [vmem:[#allocation7 + $0x50] sm:$0xff] %v246
    %343 = vst [vmem:[#allocation7 + $0x58] sm:$0xff] %v247
    %344 = vst [vmem:[#allocation7 + $0x60] sm:$0xff] %v248
    %345 = vst [vmem:[#allocation7 + $0x68] sm:$0xff] %v249
    %346 = vst [vmem:[#allocation7 + $0x70] sm:$0xff] %v250
    %347 = vst [vmem:[#allocation7 + $0x78] sm:$0xff] %v251
    %348 = vst [vmem:[#allocation7 + $0x80] sm:$0xff] %v252
    %349 = vst [vmem:[#allocation7 + $0x88] sm:$0xff] %v253
    %350 = vst [vmem:[#allocation7 + $0x90] sm:$0xff] %v254
    %351 = vst [vmem:[#allocation7 + $0x98] sm:$0xff] %v255
    %352 = vst [vmem:[#allocation7 + $0xa0] sm:$0xff] %v256
    %353 = vst [vmem:[#allocation7 + $0xa8] sm:$0xff] %v257
    %354 = vst [vmem:[#allocation7 + $0xb0] sm:$0xff] %v258
    %355 = vst [vmem:[#allocation7 + $0xb8] sm:$0xff] %v259
    %356 = vst [vmem:[#allocation7 + $0xc0] sm:$0xff] %v260
    %357 = vst [vmem:[#allocation7 + $0xc8] sm:$0xff] %v261
    %358 = vst [vmem:[#allocation7 + $0xd0] sm:$0xff] %v262
    %359 = vst [vmem:[#allocation7 + $0xd8] sm:$0xff] %v263
    %360 = vst [vmem:[#allocation7 + $0xe0] sm:$0xff] %v264
    %361 = vst [vmem:[#allocation7 + $0xe8] sm:$0xff] %v265
    %362 = vst [vmem:[#allocation7 + $0xf0] sm:$0xff] %v266
    %363 = vst [vmem:[#allocation7 + $0xf8] sm:$0xff] %v267
    %364 = vst [vmem:[#allocation7 + $0x100] sm:$0xff] %v268
    %365 = vst [vmem:[#allocation7 + $0x108] sm:$0xff] %v269
    %366 = vst [vmem:[#allocation7 + $0x110] sm:$0xff] %v270
    %367 = vst [vmem:[#allocation7 + $0x118] sm:$0xff] %v271
    %368 = vst [vmem:[#allocation7 + $0x120] sm:$0xff] %v272
    %369 = vst [vmem:[#allocation7 + $0x128] sm:$0xff] %v273
    %370 = vst [vmem:[#allocation7 + $0x130] sm:$0xff] %v274
    %371 = vst [vmem:[#allocation7 + $0x138] sm:$0xff] %v275
    %372 = vst [vmem:[#allocation7 + $0x140] sm:$0xff] %v276
    %373 = vst [vmem:[#allocation7 + $0x148] sm:$0xff] %v277
    %374 = vst [vmem:[#allocation7 + $0x150] sm:$0xff] %v278
    %375 = vst [vmem:[#allocation7 + $0x158] sm:$0xff] %v279
    %376 = vst [vmem:[#allocation7 + $0x160] sm:$0xff] %v280
    %377 = vst [vmem:[#allocation7 + $0x168] sm:$0xff] %v281
    %378 = vst [vmem:[#allocation7 + $0x170] sm:$0xff] %v282
    %379 = vst [vmem:[#allocation7 + $0x178] sm:$0xff] %v283
    %380 = vst [vmem:[#allocation7 + $0x180] sm:$0xff] %v284
    %381 = vst [vmem:[#allocation7 + $0x188] sm:$0xff] %v285
    %382 = vst [vmem:[#allocation7 + $0x190] sm:$0xff] %v286
    %383 = vst [vmem:[#allocation7 + $0x198] sm:$0xff] %v287
    %384 = vst [vmem:[#allocation7 + $0x1a0] sm:$0xff] %v288
    %385 = vst [vmem:[#allocation7 + $0x1a8] sm:$0xff] %v289
    %386 = vst [vmem:[#allocation7 + $0x1b0] sm:$0xff] %v290
    %387 = vst [vmem:[#allocation7 + $0x1b8] sm:$0xff] %v291
    %388 = vst [vmem:[#allocation7 + $0x1c0] sm:$0xff] %v292
    %389 = vst [vmem:[#allocation7 + $0x1c8] sm:$0xff] %v293
    %390 = vst [vmem:[#allocation7 + $0x1d0] sm:$0xff] %v294
    %391 = vst [vmem:[#allocation7 + $0x1d8] sm:$0xff] %v295
    %392 = vst [vmem:[#allocation7 + $0x1e0] sm:$0xff] %v296
    %393 = vst [vmem:[#allocation7 + $0x1e8] sm:$0xff] %v297
    %394 = vst [vmem:[#allocation7 + $0x1f0] sm:$0xff] %v298
    %395 = vst [vmem:[#allocation7 + $0x1f8] sm:$0xff] %v299
    %396 = vst [vmem:[#allocation7 + $0x200] sm:$0xff] %v300
    %397 = vst [vmem:[#allocation7 + $0x208] sm:$0xff] %v301
    %398 = vst [vmem:[#allocation7 + $0x210] sm:$0xff] %v302
    %399 = vst [vmem:[#allocation7 + $0x218] sm:$0xff] %v303
    %400 = vst [vmem:[#allocation7 + $0x220] sm:$0xff] %v304
    %401 = vst [vmem:[#allocation7 + $0x228] sm:$0xff] %v305
    %402 = vst [vmem:[#allocation7 + $0x230] sm:$0xff] %v306
    %403 = vst [vmem:[#allocation7 + $0x238] sm:$0xff] %v307
    %404 = vst [vmem:[#allocation7 + $0x240] sm:$0xff] %v308
    %405 = vst [vmem:[#allocation7 + $0x248] sm:$0xff] %v309
    %406 = vst [vmem:[#allocation7 + $0x250] sm:$0xff] %v310
    %407 = vst [vmem:[#allocation7 + $0x258] sm:$0xff] %v311
    %408 = vst [vmem:[#allocation7 + $0x260] sm:$0xff] %v312
    %409 = vst [vmem:[#allocation7 + $0x268] sm:$0xff] %v313
    %410 = vst [vmem:[#allocation7 + $0x270] sm:$0xff] %v314
    %411 = vst [vmem:[#allocation7 + $0x278] sm:$0xff] %v315
    %412 = vst [vmem:[#allocation7 + $0x280] sm:$0xff] %v316
    %413 = vst [vmem:[#allocation7 + $0x288] sm:$0xff] %v317
    %414 = vst [vmem:[#allocation7 + $0x290] sm:$0xff] %v318
    %415 = vst [vmem:[#allocation7 + $0x298] sm:$0xff] %v319
    %416 = vst [vmem:[#allocation7 + $0x2a0] sm:$0xff] %v320
    %417 = vst [vmem:[#allocation7 + $0x2a8] sm:$0xff] %v321
    %418 = vst [vmem:[#allocation7 + $0x2b0] sm:$0xff] %v322
    %419 = vst [vmem:[#allocation7 + $0x2b8] sm:$0xff] %v323
    %420 = vst [vmem:[#allocation7 + $0x2c0] sm:$0xff] %v324
    %421 = vst [vmem:[#allocation7 + $0x2c8] sm:$0xff] %v325
    %422 = vst [vmem:[#allocation7 + $0x2d0] sm:$0xff] %v326
    %423 = vst [vmem:[#allocation7 + $0x2d8] sm:$0xff] %v327
    %424 = vst [vmem:[#allocation7 + $0x2e0] sm:$0xff] %v328
    %425 = vst [vmem:[#allocation7 + $0x2e8] sm:$0xff] %v329
    %426 = vst [vmem:[#allocation7 + $0x2f0] sm:$0xff] %v330
    %427 = vst [vmem:[#allocation7 + $0x2f8] sm:$0xff] %v331
    // Predicated region
    $region18: #{pallas_add.1} parent=1 // pred_check
      _
    $region19: #{pallas_add.1} parent=1 // pred_check_branch
      %429 = sbr.rel (0) target = $region21
    $region20: #{pallas_add.1} parent=1 // pred_region
      %431 = vsyncadd [#allocation4], 0
      %s432 = sshll.u32 [#allocation7], 4
      %s433 = int_to_ptr.vmem [resolvable:$true] %s432
      %s434 = sshll.u32 %s2, 4
      %s435 = int_to_ptr.hbm [resolvable:$true] %s434
      %440 = dma.vmem_to_hbm [thread:$0]  %s433, 12288, %s435, [#allocation4], 256, 256, 16
    $region21: #{pallas_add.1} parent=1 // pred_fallthru
      _
    // Predicated region
    $region22: #{pallas_add.1} parent=1 // pred_check
      _
    $region23: #{pallas_add.1} parent=1 // pred_check_branch
      %442 = sbr.rel (0) target = $region25
    $region24: #{pallas_add.1} parent=1 // pred_region
      %444 = dma.done [#allocation4], 12288
    $region25: #{pallas_add.1} parent=1 // pred_fallthru
      _
    %445 = vsyncpa [#allocation3], 1
    %446 = vsyncpa [#allocation6], 1
    %447 = vsyncpa [#allocation4], 1

</llo_original>
